<compile_context>
chip_gen: v5e
topology: v5e:2x2
jax: 0.10.0
libtpu: 0.0.40
codegen_flags: <defaults>
</compile_context>

<pallas_src>
import jax
import jax.numpy as jnp
from jax import lax
from jax.experimental import pallas as pl
from jax.experimental.pallas import tpu as pltpu

# ---- model hyper-parameters (small, consistent with the module) -------------
IN_CH = 4            # input image channels
N_FEATURE = 32       # pretrained.last_linear.in_features (stand-in)
CONV1D_IN = 16       # Conv1d in_channels, fixed by the module definition
NUM_CLASSES = 28     # HPA-style num_classes
SEQ_L = N_FEATURE // CONV1D_IN   # pooled features viewed as (N, 16, SEQ_L)

C_PAD = 8            # MXU contraction: 4 real channels + 1 ones(bias) + 3 zero pad
INNER_CHUNK = 1024   # lanes per in-kernel chunk; h=(32,1024) f32 = 32 vregs
DEFAULT_MAX_S_TILE = 65536   # spatial lanes per grid step (bf16 x: 0.5 MiB/step)


# ---------------------------- fused Pallas kernel -----------------------------
def _make_fused_kernel(*, f, c, c_pad, kl, chunk, n_chunks, inv_s, pad_count):
    """Fused backbone + GAP + Conv1d-head kernel.

    Grid: (N, num_S_tiles).  Refs per step:
      x_ref    : (C, tS) bf16   input tile, spatial on lanes (NCHW consumed as-is)
      ws_ref   : (F, 8)  f32    stem weight, bias folded into col C, zero-padded
      bs_ref   : (F, 1)  f32    stem bias (for the exact pad-correction only)
      wcls_ref : (F, K*L) f32   Conv1d(16,K,1) linearised over the pooled vector
      bcls_ref : (1, K*L) f32   Conv1d bias expanded to (k,l) pairs
      o_ref    : (1, K*L) f32   logits row for image n
      acc_ref  : (F, 128) f32   lane-partial GAP sums (VMEM scratch)
    """
    def kernel(x_ref, ws_ref, bs_ref, wcls_ref, bcls_ref, o_ref, acc_ref):
        s = pl.program_id(1)

        @pl.when(s == 0)
        def _init():
            acc_ref[...] = jnp.zeros_like(acc_ref)

        w = ws_ref[...]                                   # (F, 8) f32, bias in col c
        # Loop-invariant augmentation rows appended to each x chunk: row 0 = ones
        # (carries the bias through the matmul), rest = zeros (contraction pad to 8).
        aug = (lax.broadcasted_iota(jnp.int32, (c_pad - c, chunk), 0) == 0
               ).astype(jnp.float32)

        def chunk_step(j, part):
            off = pl.multiple_of(j * chunk, 128)
            xi = x_ref[:, pl.ds(off, chunk)].astype(jnp.float32)      # (C, chunk)
            xi8 = jnp.concatenate([xi, aug], axis=0)                  # (8, chunk)
            h = jnp.dot(w, xi8, preferred_element_type=jnp.float32)   # MXU (F, chunk)
            h = jnp.maximum(h, 0.0)                                   # ReLU (bias folded)
            # lane-tile sum into (F,128): 128-lane-aligned slices -> pure VALU adds
            psum = h[:, 0:128]
            for t in range(1, chunk // 128):
                psum = psum + h[:, t * 128:(t + 1) * 128]
            return part + psum

        part0 = jnp.zeros((f, 128), jnp.float32)
        part = lax.fori_loop(0, n_chunks, chunk_step, part0,
                             unroll=min(n_chunks, 8))
        acc_ref[...] += part                               # one (F,128) RMW per step

        @pl.when(s == pl.num_programs(1) - 1)
        def _epilogue():
            gap = jnp.sum(acc_ref[...], axis=1, keepdims=True)        # (F,1) XLU, once
            if pad_count:
                # zero-padded spatial positions each contributed ReLU(b): remove exactly
                gap = gap - float(pad_count) * jnp.maximum(bs_ref[...], 0.0)
            pooled = gap * inv_s                                      # (F, 1)
            # Dropout(p=0.2) is identity at inference (eval mode).
            # Conv1d(16, K, 1) on pooled.view(16, L): broadcast-mul + sublane reduce
            # against the linearised (F, K*L) weight -> (1, K*L) logits row.
            logits = jnp.sum(wcls_ref[...] * pooled, axis=0, keepdims=True)
            o_ref[...] = logits + bcls_ref[...]

    return kernel


# ------------------------------ tiling plan ------------------------------------
def _plan_spatial(s_total, max_tile=DEFAULT_MAX_S_TILE):
    """Return (t_s, steps, s_pad): balanced lane-aligned spatial tiles."""
    steps = -(-s_total // max_tile)
    per = -(-s_total // steps)
    gran = INNER_CHUNK if per >= INNER_CHUNK else 128
    t_s = -(-per // gran) * gran
    return t_s, steps, steps * t_s


def _pick_chunk(t_s):
    """Largest multiple of 128 dividing t_s, capped at INNER_CHUNK."""
    chunk = min(INNER_CHUNK, t_s)
    while t_s % chunk:
        chunk -= 128
    return chunk


# ------------------------------ wrapper ---------------------------------------
def transfered_model_forward(x_nchw, kparams, *, s_tile=None):
    """Forward pass matching TransferedModel.forward(x) in eval mode.

    Returns logits with PyTorch Conv1d layout (N, num_classes, L).
    """
    n, c, hh, ww = x_nchw.shape
    s_total = hh * ww
    if s_tile is None:
        t_s, steps, s_pad = _plan_spatial(s_total)
    else:
        assert s_tile % 128 == 0, s_tile
        t_s = s_tile
        steps = -(-s_total // t_s)
        s_pad = steps * t_s
    pad_count = s_pad - s_total
    chunk = _pick_chunk(t_s)
    n_chunks = t_s // chunk

    # NCHW -> (N, C, S): pure row-major reshape (no transpose).  bf16 halves the
    # kernel's HBM read; upstream producers should emit bf16 so the cast is free.
    x_ncs = x_nchw.reshape(n, c, s_total).astype(jnp.bfloat16)
    if pad_count:
        x_ncs = jnp.pad(x_ncs, ((0, 0), (0, 0), (0, pad_count)))

    ws_aug, bs = kparams["ws_aug"], kparams["bs"]
    wcls, bcls = kparams["wcls"], kparams["bcls"]
    f = ws_aug.shape[0]
    c_pad = ws_aug.shape[1]
    kl = wcls.shape[1]

    kernel = _make_fused_kernel(f=f, c=c, c_pad=c_pad, kl=kl, chunk=chunk,
                                n_chunks=n_chunks, inv_s=1.0 / float(s_total),
                                pad_count=pad_count)

    cost = pl.CostEstimate(
        flops=int(2 * f * c_pad * s_pad * n + 2 * f * kl * n),
        transcendentals=0,
        bytes_accessed=int(n * c * s_pad * 2
                           + 4 * (f * c_pad + f + f * kl + kl)
                           + n * kl * 4))

    out = pl.pallas_call(
        kernel,
        out_shape=jax.ShapeDtypeStruct((n, 1, kl), jnp.float32),
        grid_spec=pltpu.PrefetchScalarGridSpec(
            num_scalar_prefetch=0,
            grid=(n, steps),
            in_specs=[
                # input: one image, one spatial tile per step (lane-dense)
                pl.BlockSpec((None, c, t_s), lambda i, s: (i, 0, s)),
                # weights/bias: whole (tiny) arrays, resident across the grid
                pl.BlockSpec((f, c_pad), lambda i, s: (0, 0)),
                pl.BlockSpec((f, 1), lambda i, s: (0, 0)),
                pl.BlockSpec((f, kl), lambda i, s: (0, 0)),
                pl.BlockSpec((1, kl), lambda i, s: (0, 0)),
            ],
            # same output block across the S axis -> resident, written only in
            # the pl.when(s == last) epilogue.
            out_specs=pl.BlockSpec((None, 1, kl), lambda i, s: (i, 0, 0)),
            scratch_shapes=[pltpu.VMEM((f, 128), jnp.float32)],
        ),
        compiler_params=pltpu.CompilerParams(
            dimension_semantics=("parallel", "arbitrary"),
        ),
        cost_estimate=cost,
    )(x_ncs, ws_aug, bs, wcls, bcls)

    # (N, 1, K*L) -> (N, K, L): row-major order is exactly k*L + l (free reshape).
    return out.reshape(n, NUM_CLASSES, SEQ_L)


# ------------------------------ parameters ------------------------------------
def make_params(key):
    """Parameters in PyTorch layouts."""
    k1, k2, k3, k4 = jax.random.split(key, 4)
    return {
        "w_stem": 0.1 * jax.random.normal(k1, (N_FEATURE, IN_CH, 1, 1), jnp.float32),
        "b_stem": 0.1 * jax.random.normal(k2, (N_FEATURE,), jnp.float32),
        "w_cls": 0.1 * jax.random.normal(k3, (NUM_CLASSES, CONV1D_IN, 1), jnp.float32),
        "b_cls": 0.1 * jax.random.normal(k4, (NUM_CLASSES,), jnp.float32),
    }


def prepare_params(pt):
    """Convert PyTorch-layout weights into the fused-kernel operands (one-time).

    Stem: ws_aug[:, :C] = w, ws_aug[:, C] = b (multiplies the in-kernel ones row),
    remaining columns zero (contraction padded to 8 for the MXU).
    Head: Conv1d(16, K, 1) on pooled.view(16, L) is an exact linear map on the
    flattened F=16*L pooled vector:
        wcls[f, k*L + l] = w_cls[k, f // L] * (f % L == l);  bcls[0, k*L+l] = b_cls[k].
    """
    ws = pt["w_stem"][:, :, 0, 0].astype(jnp.float32)                # (F, C)
    bs = pt["b_stem"].astype(jnp.float32).reshape(N_FEATURE, 1)      # (F, 1)
    ws_aug = jnp.concatenate(
        [ws, bs, jnp.zeros((N_FEATURE, C_PAD - IN_CH - 1), jnp.float32)], axis=1)

    wc = pt["w_cls"][:, :, 0].astype(jnp.float32)                    # (K, 16)
    bc = pt["b_cls"].astype(jnp.float32)                             # (K,)
    f_idx = jnp.arange(N_FEATURE)
    m_idx = jnp.arange(NUM_CLASSES * SEQ_L)
    c_of_f = f_idx // SEQ_L
    l_of_f = f_idx % SEQ_L
    k_of_m = m_idx // SEQ_L
    l_of_m = m_idx % SEQ_L
    sel = (l_of_f[:, None] == l_of_m[None, :]).astype(jnp.float32)   # (F, K*L)
    wcls = wc[k_of_m[None, :], c_of_f[:, None]] * sel                # (F, K*L)
    bcls = bc[k_of_m][None, :]                                       # (1, K*L)
    return {"ws_aug": ws_aug, "bs": bs, "wcls": wcls, "bcls": bcls}


# ------------------------------ reference -------------------------------------
def _reference_forward(x_nchw, pt):
    """Pure-jnp f32 reference with PyTorch semantics (eval-mode Dropout = identity)."""
    n, c, hh, ww = x_nchw.shape
    xs = x_nchw.reshape(n, c, hh * ww)
    ws = pt["w_stem"][:, :, 0, 0]
    h = (jnp.einsum("fc,ncs->nfs", ws, xs, precision="highest")
         + pt["b_stem"][None, :, None])
    h = jnp.maximum(h, 0.0)
    pooled = jnp.mean(h, axis=2)                       # (N, F)
    feats = pooled.reshape(n, CONV1D_IN, SEQ_L)        # (N, 16, L)
    wc = pt["w_cls"][:, :, 0]                          # (K, 16)
    out = (jnp.einsum("kc,ncl->nkl", wc, feats, precision="highest")
           + pt["b_cls"][None, :, None])
    return out


if __name__ == "__main__":
    key = jax.random.PRNGKey(0)
    kx1, kx2, kp = jax.random.split(key, 3)
    pt_params = make_params(kp)
    kparams = prepare_params(pt_params)

    # Case 1: 16x16 images, s_tile=128 forces a 2-step spatial grid so the
    # pl.when(init)/pl.when(last) resident-accumulator path is exercised.
    x1 = jax.random.normal(kx1, (2, IN_CH, 16, 16), jnp.float32)      # NCHW
    out1 = jax.block_until_ready(transfered_model_forward(x1, kparams, s_tile=128))
    assert out1.shape == (2, NUM_CLASSES, SEQ_L), out1.shape
    ref1 = _reference_forward(x1, pt_params)
    err1 = float(jnp.max(jnp.abs(out1 - ref1)))
    # bf16 activation stream -> tolerance loosened vs the f32 reference.
    assert jnp.allclose(out1, ref1, atol=1e-2, rtol=1e-2), f"max abs err={err1}"

    # Case 2: 31x64 image (S=1984, not a multiple of 128) under the default plan:
    # exercises zero-pad + exact GAP correction and the in-kernel chunk loop
    # (t_s=2048, chunk=1024, 2 chunks).
    x2 = jax.random.normal(kx2, (1, IN_CH, 31, 64), jnp.float32)
    out2 = jax.block_until_ready(transfered_model_forward(x2, kparams))
    assert out2.shape == (1, NUM_CLASSES, SEQ_L), out2.shape
    ref2 = _reference_forward(x2, pt_params)
    err2 = float(jnp.max(jnp.abs(out2 - ref2)))
    assert jnp.allclose(out2, ref2, atol=1e-2, rtol=1e-2), f"max abs err={err2}"

    print("KERNEL_OK")
</pallas_src>

<mosaic_0001>
module attributes {stable_mosaic.version = 11 : i64} {
  func.func @kernel(%arg0: i32, %arg1: i32, %arg2: memref<1x4x128xbf16, #tpu.memory_space<vmem>>, %arg3: memref<32x8xf32, #tpu.memory_space<vmem>>, %arg4: memref<32x1xf32, #tpu.memory_space<vmem>>, %arg5: memref<32x56xf32, #tpu.memory_space<vmem>>, %arg6: memref<1x56xf32, #tpu.memory_space<vmem>>, %arg7: memref<1x1x56xf32, #tpu.memory_space<vmem>>, %arg8: memref<32x128xf32, #tpu.memory_space<vmem>>) attributes {dimension_semantics = [#tpu.dimension_semantics<parallel>, #tpu.dimension_semantics<arbitrary>], iteration_bounds = array<i64: 2, 2>, scalar_prefetch = 0 : i64, scratch_operands = 1 : i64, tpu.core_type = #tpu.core_type<tc>, window_params = [{transform_indices = @transform_0, window_bounds = array<i64: 1, 4, 128>}, {pipeline_mode = #tpu.pipeline_mode<synchronous>, transform_indices = @transform_1, window_bounds = array<i64: 32, 8>}, {pipeline_mode = #tpu.pipeline_mode<synchronous>, transform_indices = @transform_2, window_bounds = array<i64: 32, 1>}, {pipeline_mode = #tpu.pipeline_mode<synchronous>, transform_indices = @transform_3, window_bounds = array<i64: 32, 56>}, {pipeline_mode = #tpu.pipeline_mode<synchronous>, transform_indices = @transform_4, window_bounds = array<i64: 1, 56>}, {transform_indices = @transform_5, window_bounds = array<i64: 1, 1, 56>}]} {
    %c0_i32 = arith.constant 0 : i32
    %0 = arith.cmpi eq, %arg1, %c0_i32 : i32
    %1 = arith.extui %0 : i1 to i32
    %c0_i32_0 = arith.constant 0 : i32
    %2 = arith.cmpi ne, %1, %c0_i32_0 : i32
    scf.if %2 {
      %cst_14 = arith.constant 0.000000e+00 : f32
      %27 = vector.broadcast %cst_14 : f32 to vector<32x128xf32>
      %c0_15 = arith.constant 0 : index
      %c0_16 = arith.constant 0 : index
      %28 = vector.load %arg8[%c0_15, %c0_16] : memref<32x128xf32, #tpu.memory_space<vmem>>, vector<32x128xf32>
      tpu.vector_store %arg8[%c0_15, %c0_16], %27 {strides = array<i32>} : memref<32x128xf32, #tpu.memory_space<vmem>>, vector<32x128xf32>,
    } else {
    }
    %c0 = arith.constant 0 : index
    %c0_1 = arith.constant 0 : index
    %3 = vector.load %arg3[%c0, %c0_1] : memref<32x8xf32, #tpu.memory_space<vmem>>, vector<32x8xf32>
    %4 = tpu.iota {dimensions = array<i32: 0>} : vector<4x128xi32>
    %c0_i32_2 = arith.constant 0 : i32
    %5 = vector.broadcast %c0_i32_2 : i32 to vector<4x128xi32>
    %6 = arith.cmpi eq, %4, %5 : vector<4x128xi32>
    %7 = arith.extui %6 : vector<4x128xi1> to vector<4x128xi32>
    %8 = arith.sitofp %7 : vector<4x128xi32> to vector<4x128xf32>
    %cst = arith.constant 0.000000e+00 : f32
    %9 = vector.broadcast %cst : f32 to vector<32x128xf32>
    %c0_i32_3 = arith.constant 0 : i32
    %c128_i32 = arith.constant 128 : i32
    %10 = arith.muli %c0_i32_3, %c128_i32 : i32
    %11 = tpu.assume_multiple %10, 128 : i32
    %c0_4 = arith.constant 0 : index
    %c0_5 = arith.constant 0 : index
    %12 = arith.index_cast %11 : i32 to index
    %13 = vector.load %arg2[%c0_4, %c0_5, %12] : memref<1x4x128xbf16, #tpu.memory_space<vmem>>, vector<1x4x128xbf16>
    %14 = vector.shape_cast %13 : vector<1x4x128xbf16> to vector<4x128xbf16>
    %15 = arith.extf %14 : vector<4x128xbf16> to vector<4x128xf32>
    %16 = tpu.concatenate %15, %8 in 0 : vector<4x128xf32>, vector<4x128xf32> -> vector<8x128xf32>
    %cst_6 = arith.constant dense<0.000000e+00> : vector<32x128xf32>
    %17 = tpu.matmul %3, %16, %cst_6 {dimension_numbers = #tpu.dot_dimension_numbers<[1], [0], [0], [1], [0, 0, 1, 1], [], []>} : vector<32x8xf32>, vector<8x128xf32>, vector<32x128xf32> -> vector<32x128xf32>
    %cst_7 = arith.constant 0.000000e+00 : f32
    %18 = vector.broadcast %cst_7 : f32 to vector<32x128xf32>
    %19 = arith.maximumf %17, %18 : vector<32x128xf32>
    %20 = arith.addf %9, %19 : vector<32x128xf32>
    %c1_i32 = arith.constant 1 : i32
    %c0_8 = arith.constant 0 : index
    %c0_9 = arith.constant 0 : index
    %21 = vector.load %arg8[%c0_8, %c0_9] : memref<32x128xf32, #tpu.memory_space<vmem>>, vector<32x128xf32>
    %22 = arith.addf %21, %20 : vector<32x128xf32>
    %c0_10 = arith.constant 0 : index
    %c0_11 = arith.constant 0 : index
    %23 = vector.load %arg8[%c0_10, %c0_11] : memref<32x128xf32, #tpu.memory_space<vmem>>, vector<32x128xf32>
    tpu.vector_store %arg8[%c0_10, %c0_11], %22 {strides = array<i32>} : memref<32x128xf32, #tpu.memory_space<vmem>>, vector<32x128xf32>,
    %c1_i32_12 = arith.constant 1 : i32
    %24 = arith.cmpi eq, %arg1, %c1_i32_12 : i32
    %25 = arith.extui %24 : i1 to i32
    %c0_i32_13 = arith.constant 0 : i32
    %26 = arith.cmpi ne, %25, %c0_i32_13 : i32
    scf.if %26 {
      %c0_14 = arith.constant 0 : index
      %c0_15 = arith.constant 0 : index
      %27 = vector.load %arg8[%c0_14, %c0_15] : memref<32x128xf32, #tpu.memory_space<vmem>>, vector<32x128xf32>
      %cst_16 = arith.constant dense<0.000000e+00> : vector<32xf32>
      %28 = vector.multi_reduction <add>, %27, %cst_16 [1] : vector<32x128xf32> to vector<32xf32>
      %29 = vector.shape_cast %28 : vector<32xf32> to vector<32x1xf32>
      %cst_17 = arith.constant 3.906250e-03 : f32
      %30 = vector.broadcast %cst_17 : f32 to vector<32x1xf32>
      %31 = arith.mulf %29, %30 : vector<32x1xf32>
      %c0_18 = arith.constant 0 : index
      %c0_19 = arith.constant 0 : index
      %32 = vector.load %arg5[%c0_18, %c0_19] : memref<32x56xf32, #tpu.memory_space<vmem>>, vector<32x56xf32>
      %33 = vector.broadcast %31 : vector<32x1xf32> to vector<32x56xf32>
      %34 = arith.mulf %32, %33 : vector<32x56xf32>
      %cst_20 = arith.constant dense<0.000000e+00> : vector<56xf32>
      %35 = vector.multi_reduction <add>, %34, %cst_20 [0] : vector<32x56xf32> to vector<56xf32>
      %36 = vector.shape_cast %35 : vector<56xf32> to vector<1x56xf32>
      %c0_21 = arith.constant 0 : index
      %c0_22 = arith.constant 0 : index
      %37 = vector.load %arg6[%c0_21, %c0_22] : memref<1x56xf32, #tpu.memory_space<vmem>>, vector<1x56xf32>
      %38 = arith.addf %36, %37 : vector<1x56xf32>
      %c0_23 = arith.constant 0 : index
      %c0_24 = arith.constant 0 : index
      %c0_25 = arith.constant 0 : index
      %39 = vector.load %arg7[%c0_23, %c0_24, %c0_25] : memref<1x1x56xf32, #tpu.memory_space<vmem>>, vector<1x1x56xf32>
      %40 = vector.shape_cast %39 : vector<1x1x56xf32> to vector<1x56xf32>
      %41 = vector.shape_cast %38 : vector<1x56xf32> to vector<1x1x56xf32>
      tpu.vector_store %arg7[%c0_23, %c0_24, %c0_25], %41 {strides = array<i32>} : memref<1x1x56xf32, #tpu.memory_space<vmem>>, vector<1x1x56xf32>,
    } else {
    }
    return
  }
  func.func @transform_0(%arg0: i32, %arg1: i32) -> (i32, i32, i32) {
    %c0_i32 = arith.constant 0 : i32
    %c0_i32_0 = arith.constant 0 : i32
    return %arg0, %c0_i32, %arg1 : i32, i32, i32
  }
  func.func @transform_1(%arg0: i32, %arg1: i32) -> (i32, i32) {
    %c0_i32 = arith.constant 0 : i32
    %c0_i32_0 = arith.constant 0 : i32
    %c0_i32_1 = arith.constant 0 : i32
    return %c0_i32, %c0_i32_0 : i32, i32
  }
  func.func @transform_2(%arg0: i32, %arg1: i32) -> (i32, i32) {
    %c0_i32 = arith.constant 0 : i32
    %c0_i32_0 = arith.constant 0 : i32
    %c0_i32_1 = arith.constant 0 : i32
    return %c0_i32, %c0_i32_0 : i32, i32
  }
  func.func @transform_3(%arg0: i32, %arg1: i32) -> (i32, i32) {
    %c0_i32 = arith.constant 0 : i32
    %c0_i32_0 = arith.constant 0 : i32
    %c0_i32_1 = arith.constant 0 : i32
    return %c0_i32, %c0_i32_0 : i32, i32
  }
  func.func @transform_4(%arg0: i32, %arg1: i32) -> (i32, i32) {
    %c0_i32 = arith.constant 0 : i32
    %c0_i32_0 = arith.constant 0 : i32
    %c0_i32_1 = arith.constant 0 : i32
    return %c0_i32, %c0_i32_0 : i32, i32
  }
  func.func @transform_5(%arg0: i32, %arg1: i32) -> (i32, i32, i32) {
    %c0_i32 = arith.constant 0 : i32
    %c0_i32_0 = arith.constant 0 : i32
    %c0_i32_1 = arith.constant 0 : i32
    return %arg0, %c0_i32, %c0_i32_0 : i32, i32, i32
  }
}

</mosaic_0001>

<llo_original>
// kernel: tpu_custom_call.1
$region0: #{tpu_custom_call.1}
  #allocation0 [shape = 'u32[]', space=smem, size = 0x4, offset = 0x4, fixed_abs, tag = 'smem constant byte address 0x4 - core index']
  #allocation1 [shape = 'u32[72,128]{1,0:T(1,128)}', space=vmem, size = 0x9000, scoped, tag = 'internal scratch']
  #allocation2 [shape = 'f32[32,128]{1,0:T(8,128)}', space=vmem, size = 0x4000, scoped, tag = 'scratch operand']
  %s0 = inlined_call_operand.vmem [shape: bf16[2,4,256], index: 0, kind: input, shape index: {}]
  %s1 = inlined_call_operand.vmem [shape: f32[32,8], index: 1, kind: input, shape index: {}]
  %s2 = inlined_call_operand.vmem [shape: f32[32,1], index: 2, kind: input, shape index: {}]
  %s3 = inlined_call_operand.vmem [shape: f32[32,56], index: 3, kind: input, shape index: {}]
  %s4 = inlined_call_operand.vmem [shape: f32[1,56], index: 4, kind: input, shape index: {}]
  %s5 = inlined_call_operand.hbm [shape: f32[2,1,56], index: 5, kind: output, shape index: {}]
  %s6 = sld [smem:[#allocation0]]
  $region61: #{tpu_custom_call.1} parent=0
    _
  %s8 = ssub.s32 1, %s6
  %s9 = scalar_select 0, %s8, %s6
  $region1: #{tpu_custom_call.1} parent=0
    #allocation3 [shape = 'u8[1024]{0}', space=vmem, size = 0x400, scoped, tag = 'output window, operand 0']
    #allocation4 [shape = 's32[2]{0}', space=sflag, size = 0x8, scoped, tag = 'scoped memory for tpu_custom_call.1']
    %10 = vsyncpa [#allocation4], 0
    %s11 = scalar_lea.sflag [#allocation4], 1
    %12 = vsyncpa %s11, 0
    loop: start=0, step=1, limit=6
    $region2: #{tpu_custom_call.1} parent=1 // loop_pre_header
      _
    $region3: #{tpu_custom_call.1} parent=1 // loop_header
      %s14 = sphi 0, %s18
      %p15 = scmp.ge.s32.totalorder %s14, 6
      %s21 = sphi 0, %s33
      %s22 = sphi 0, %s29
      %s23 = sphi 0, %s21
      %s24 = sphi 0, %s22
      %s25 = sphi 0, %s23
      %s26 = sphi 0, %s24
      %s38 = sphi 0, %s40
      %s41 = sphi 0, %s38
      %s42 = sphi 0, %s41
      %s58 = sphi 0, %s42
      %s62 = sphi 0, %s62
      %s64 = sphi 0, %s62
      %s65 = sphi 0, %s64
      %s79 = sphi 0, %s65
      %s83 = sphi 0, %s83
      %s85 = sphi 0, %s83
      %s86 = sphi 0, %s85
      %s100 = sphi 0, %s86
      %s104 = sphi 0, %s104
      %s106 = sphi 0, %s104
      %s107 = sphi 0, %s106
      %s121 = sphi 0, %s107
      %s125 = sphi 0, %s125
      %s127 = sphi 0, %s125
      %s128 = sphi 0, %s127
      %s142 = sphi 0, %s128
      %s148 = sphi 0, %s150
      %s151 = sphi 0, %s148
      %s152 = sphi 0, %s151
      %s168 = sphi 0, %s152
    $region4: #{tpu_custom_call.1} parent=1 // loop_header_branch
      %17 = sbr.rel (%p15) target = $region8
    $region5: #{tpu_custom_call.1} parent=1 // loop_body
      %s19 = ssub.s32 %s14, 1
      %s20 = ssub.s32 %s14, 2
      %s27 = sadd.s32 1, %s22
      %p28 = scmp.ge.s32.totalorder %s27, 2
      %s29 = scalar_select %p28, 0, %s27
      %s30 = sadd.s32 1, %s21
      %s31 = scalar_select %p28, %s30, %s21
      %p32 = scmp.ge.s32.totalorder %s31, 2
      %s33 = scalar_select %p32, 0, %s31
      %s34 = ssub.s32 %s21, %s33
      %s35 = ssub.s32 %s22, %s29
      %s36 = sor.u32 %s34, %s35
      %p37 = scmp.eq.s32.totalorder %s36, 0
      %s39 = sadd.s32 %s38, 1
      %s40 = scalar_select %p37, %s38, %s39
      %p43 = pneg %p37
      %p44 = scmp.eq.s32.totalorder %s14, 3
      %p45 = por %p43, %p44
      %p46 = scmp.ne.s32.totalorder %s38, %s41
      %p47 = scmp.eq.s32.totalorder %s14, 0
      %p48 = por %p46, %p47
      %p49 = scmp.ne.s32.totalorder %s38, %s41
      %p50 = scmp.eq.s32.totalorder %s19, 3
      %p51 = por %p49, %p50
      %p52 = scmp.ne.s32.totalorder %s41, %s42
      %p53 = scmp.eq.s32.totalorder %s19, 0
      %p54 = por %p52, %p53
      %p55 = scmp.ne.s32.totalorder %s41, %s42
      %p56 = scmp.eq.s32.totalorder %s20, 3
      %p57 = por %p55, %p56
      %p59 = scmp.ne.s32.totalorder %s42, %s58
      %p60 = scmp.eq.s32.totalorder %s20, 0
      %p61 = por %p59, %p60
      %s63 = sadd.s32 %s62, 1
      %p66 = scmp.eq.s32.totalorder %s14, 3
      %p67 = scmp.ne.s32.totalorder %s62, %s64
      %p68 = scmp.eq.s32.totalorder %s14, 0
      %p69 = por %p67, %p68
      %p70 = scmp.ne.s32.totalorder %s62, %s64
      %p71 = scmp.eq.s32.totalorder %s19, 3
      %p72 = por %p70, %p71
      %p73 = scmp.ne.s32.totalorder %s64, %s65
      %p74 = scmp.eq.s32.totalorder %s19, 0
      %p75 = por %p73, %p74
      %p76 = scmp.ne.s32.totalorder %s64, %s65
      %p77 = scmp.eq.s32.totalorder %s20, 3
      %p78 = por %p76, %p77
      %p80 = scmp.ne.s32.totalorder %s65, %s79
      %p81 = scmp.eq.s32.totalorder %s20, 0
      %p82 = por %p80, %p81
      %s84 = sadd.s32 %s83, 1
      %p87 = scmp.eq.s32.totalorder %s14, 3
      %p88 = scmp.ne.s32.totalorder %s83, %s85
      %p89 = scmp.eq.s32.totalorder %s14, 0
      %p90 = por %p88, %p89
      %p91 = scmp.ne.s32.totalorder %s83, %s85
      %p92 = scmp.eq.s32.totalorder %s19, 3
      %p93 = por %p91, %p92
      %p94 = scmp.ne.s32.totalorder %s85, %s86
      %p95 = scmp.eq.s32.totalorder %s19, 0
      %p96 = por %p94, %p95
      %p97 = scmp.ne.s32.totalorder %s85, %s86
      %p98 = scmp.eq.s32.totalorder %s20, 3
      %p99 = por %p97, %p98
      %p101 = scmp.ne.s32.totalorder %s86, %s100
      %p102 = scmp.eq.s32.totalorder %s20, 0
      %p103 = por %p101, %p102
      %s105 = sadd.s32 %s104, 1
      %p108 = scmp.eq.s32.totalorder %s14, 3
      %p109 = scmp.ne.s32.totalorder %s104, %s106
      %p110 = scmp.eq.s32.totalorder %s14, 0
      %p111 = por %p109, %p110
      %p112 = scmp.ne.s32.totalorder %s104, %s106
      %p113 = scmp.eq.s32.totalorder %s19, 3
      %p114 = por %p112, %p113
      %p115 = scmp.ne.s32.totalorder %s106, %s107
      %p116 = scmp.eq.s32.totalorder %s19, 0
      %p117 = por %p115, %p116
      %p118 = scmp.ne.s32.totalorder %s106, %s107
      %p119 = scmp.eq.s32.totalorder %s20, 3
      %p120 = por %p118, %p119
      %p122 = scmp.ne.s32.totalorder %s107, %s121
      %p123 = scmp.eq.s32.totalorder %s20, 0
      %p124 = por %p122, %p123
      %s126 = sadd.s32 %s125, 1
      %p129 = scmp.eq.s32.totalorder %s14, 3
      %p130 = scmp.ne.s32.totalorder %s125, %s127
      %p131 = scmp.eq.s32.totalorder %s14, 0
      %p132 = por %p130, %p131
      %p133 = scmp.ne.s32.totalorder %s125, %s127
      %p134 = scmp.eq.s32.totalorder %s19, 3
      %p135 = por %p133, %p134
      %p136 = scmp.ne.s32.totalorder %s127, %s128
      %p137 = scmp.eq.s32.totalorder %s19, 0
      %p138 = por %p136, %p137
      %p139 = scmp.ne.s32.totalorder %s127, %s128
      %p140 = scmp.eq.s32.totalorder %s20, 3
      %p141 = por %p139, %p140
      %p143 = scmp.ne.s32.totalorder %s128, %s142
      %p144 = scmp.eq.s32.totalorder %s20, 0
      %p145 = por %p143, %p144
      %s146 = ssub.s32 %s21, %s33
      %p147 = scmp.eq.s32.totalorder %s146, 0
      %s149 = sadd.s32 %s148, 1
      %s150 = scalar_select %p147, %s148, %s149
      %p153 = pneg %p147
      %p154 = scmp.eq.s32.totalorder %s14, 3
      %p155 = por %p153, %p154
      %p156 = scmp.ne.s32.totalorder %s148, %s151
      %p157 = scmp.eq.s32.totalorder %s14, 0
      %p158 = por %p156, %p157
      %p159 = scmp.ne.s32.totalorder %s148, %s151
      %p160 = scmp.eq.s32.totalorder %s19, 3
      %p161 = por %p159, %p160
      %p162 = scmp.ne.s32.totalorder %s151, %s152
      %p163 = scmp.eq.s32.totalorder %s19, 0
      %p164 = por %p162, %p163
      %p165 = scmp.ne.s32.totalorder %s151, %s152
      %p166 = scmp.eq.s32.totalorder %s20, 3
      %p167 = por %p165, %p166
      %p169 = scmp.ne.s32.totalorder %s152, %s168
      %p170 = scmp.eq.s32.totalorder %s20, 0
      %p171 = por %p169, %p170
      %p172 = scmp.le.s32.totalorder 1, %s14
      %p173 = scmp.lt.s32.totalorder %s14, 5
      %p174 = pnand %p172, %p173
      %p175 = pneg %p174
      // Predicated region
      $region9: #{tpu_custom_call.1} parent=5 // pred_check
        _
      $region10: #{tpu_custom_call.1} parent=5 // pred_check_branch
        %177 = sbr.rel (%p174) target = $region12
      $region11: #{tpu_custom_call.1} parent=5 // pred_region
        %s178 = ssub.s32 %s14, 1
        // Predicated region
        $region13: #{tpu_custom_call.1} parent=11 // pred_check
          %p179 = pneg %p75
        $region14: #{tpu_custom_call.1} parent=11 // pred_check_branch
          %181 = sbr.rel (%p179) target = $region16
        $region15: #{tpu_custom_call.1} parent=11 // pred_region
          _
        $region16: #{tpu_custom_call.1} parent=11 // pred_fallthru
          _
        // Predicated region
        $region17: #{tpu_custom_call.1} parent=11 // pred_check
          %p182 = pneg %p96
        $region18: #{tpu_custom_call.1} parent=11 // pred_check_branch
          %184 = sbr.rel (%p182) target = $region20
        $region19: #{tpu_custom_call.1} parent=11 // pred_region
          _
        $region20: #{tpu_custom_call.1} parent=11 // pred_fallthru
          _
        // Predicated region
        $region21: #{tpu_custom_call.1} parent=11 // pred_check
          %p185 = pneg %p117
        $region22: #{tpu_custom_call.1} parent=11 // pred_check_branch
          %187 = sbr.rel (%p185) target = $region24
        $region23: #{tpu_custom_call.1} parent=11 // pred_region
          _
        $region24: #{tpu_custom_call.1} parent=11 // pred_fallthru
          _
        // Predicated region
        $region25: #{tpu_custom_call.1} parent=11 // pred_check
          %p188 = pneg %p138
        $region26: #{tpu_custom_call.1} parent=11 // pred_check_branch
          %190 = sbr.rel (%p188) target = $region28
        $region27: #{tpu_custom_call.1} parent=11 // pred_region
          _
        $region28: #{tpu_custom_call.1} parent=11 // pred_fallthru
          _
      $region12: #{tpu_custom_call.1} parent=5 // pred_fallthru
        _
      %p191 = scmp.lt.s32.totalorder %s14, 4
      // Predicated region
      $region29: #{tpu_custom_call.1} parent=5 // pred_check
        %p192 = pneg %p191
      $region30: #{tpu_custom_call.1} parent=5 // pred_check_branch
        %194 = sbr.rel (%p192) target = $region32
      $region31: #{tpu_custom_call.1} parent=5 // pred_region
        // Predicated region
        $region33: #{tpu_custom_call.1} parent=31 // pred_check
          %p195 = pneg %p48
        $region34: #{tpu_custom_call.1} parent=31 // pred_check_branch
          %197 = sbr.rel (%p195) target = $region36
        $region35: #{tpu_custom_call.1} parent=31 // pred_region
          %p198 = scmp.lt.s32.totalorder %s21, 1
          %s199 = scalar_select %p198, %s21, 1
          %p200 = scmp.lt.s32.totalorder %s22, 1
          %s201 = scalar_select %p200, %s22, 1
          %s202 = smul.addr %s199, 2
          %s203 = sadd.s32 %s201, %s202
          %s204 = smul.addr %s203, 2
          %s205 = scalar_lea.vmem %s0, %s204
        $region36: #{tpu_custom_call.1} parent=31 // pred_fallthru
          _
      $region32: #{tpu_custom_call.1} parent=5 // pred_fallthru
        _
      %p206 = scmp.le.s32.totalorder 1, %s14
      %p207 = scmp.lt.s32.totalorder %s14, 5
      %p208 = pnand %p206, %p207
      %p209 = pneg %p208
      // Predicated region
      $region37: #{tpu_custom_call.1} parent=5 // pred_check
        _
      $region38: #{tpu_custom_call.1} parent=5 // pred_check_branch
        %211 = sbr.rel (%p208) target = $region40
      $region39: #{tpu_custom_call.1} parent=5 // pred_region
        %s212 = ssub.s32 %s14, 1
        %p213 = scmp.lt.s32.totalorder %s23, 1
        %s214 = scalar_select %p213, %s23, 1
        %p215 = scmp.lt.s32.totalorder %s24, 1
        %s216 = scalar_select %p215, %s24, 1
        %s217 = smul.addr %s214, 2
        %s218 = sadd.s32 %s216, %s217
        %s219 = smul.addr %s218, 2
        %s220 = scalar_lea.vmem %s0, %s219
        %p221 = pneg %p54
        %p222 = pneg %p51
        %p223 = pneg %p75
        %p224 = pneg %p72
        %p225 = pneg %p96
        %p226 = pneg %p93
        %p227 = pneg %p117
        %p228 = pneg %p114
        %p229 = pneg %p138
        %p230 = pneg %p135
        %p231 = pneg %p164
        %p232 = pneg %p161
        %s233 = sand.u32 %s151, 1
        %s234 = scalar_lea.sflag [#allocation4], %s233
        %s235 = sand.u32 %s151, 1
        %s236 = scalar_lea.vmem [#allocation3], %s235
        %p237 = scmp.lt.s32.totalorder %s23, 1
        %s238 = scalar_select %p237, %s23, 1
        %p239 = scmp.lt.s32.totalorder %s24, 1
        %s240 = scalar_select %p239, %s24, 1
        %s241 = smul.addr %s238, 2
        %s242 = sadd.s32 %s240, %s241
        %s243 = smul.addr %s242, 2
        %s244 = scalar_lea.vmem %s0, %s243
        %p245 = scmp.eq.s32.totalorder %s24, 0
        // Predicated region
        $region41: #{tpu_custom_call.1} parent=39 // pred_check
          %p246 = pneg %p245
        $region42: #{tpu_custom_call.1} parent=39 // pred_check_branch
          %248 = sbr.rel (%p246) target = $region44
        $region43: #{tpu_custom_call.1} parent=39 // pred_region
          %249 = vst [vmem:[#allocation2] sm:$0xff] 0.0
          %250 = vst [vmem:[#allocation2 + $0x8] sm:$0xff] 0.0
          %251 = vst [vmem:[#allocation2 + $0x10] sm:$0xff] 0.0
          %252 = vst [vmem:[#allocation2 + $0x18] sm:$0xff] 0.0
        $region44: #{tpu_custom_call.1} parent=39 // pred_fallthru
          _
        %v253 = vld [vmem:[%s1] sm:$0xff]
        %v254 = vld [vmem:[%s1 + $0x8] sm:$0xff]
        %v255 = vld [vmem:[%s1 + $0x10] sm:$0xff]
        %v256 = vld [vmem:[%s1 + $0x18] sm:$0xff]
        %v257 = vlaneseq
        %v258 = vshrl.u32 %v257, 7
        %vm259 = vcmp.eq.s32.totalorder %v258, 0
        %v260 = vsel %vm259, 1, 0
        %v261 = vcvt.s32.f32 %v260
        %v262 = vld [vmem:[%s244] sm:$0x3]
        %v263 = vunpack.c.l.bf16 %v262
        %v265 = vrot.slane %v261, 4
        %vm267 = vcmask 1043456
        %v268 = vsel %vm267, %v263, %v265
        %vm269 = vcmask 64512
        %v271 = vsel %vm269, %v253, 0
        %v274 = vsel %vm269, %v254, 0
        %v277 = vsel %vm269, %v255, 0
        %v280 = vsel %vm269, %v256, 0
        %282 = vmatpush.msra.mxu0 0.0
        %283 = vmatpush.msra.mxu0 0.0
        %284 = vmatpush.msra.mxu0 0.0
        %285 = vmatpush.msra.mxu0 0.0
        %286 = vmatpush.msra.mxu0 0.0
        %287 = vmatpush.msra.mxu0 0.0
        %288 = vmatpush.msra.mxu0 0.0
        %289 = vmatpush.msra.mxu0 0.0
        %290 = vmatpush.msra.mxu0 0.0
        %291 = vmatpush.msra.mxu0 0.0
        %292 = vmatpush.msra.mxu0 0.0
        %293 = vmatpush.msra.mxu0 0.0
        %294 = vmatpush.msra.mxu0 0.0
        %295 = vmatpush.msra.mxu0 0.0
        %296 = vmatpush.msra.mxu0 0.0
        %297 = vmatpush.msra.mxu0 %v268
        %298 = vmatmul.f32.gmra.mxu0 %v271
        %v299 = vpop.f32.mrf.mxu0
        %v300 = vadd.f32 0.0, %v299
        %301 = vmatmul.f32.gmra.mxu0 %v274
        %v302 = vpop.f32.mrf.mxu0
        %v303 = vadd.f32 0.0, %v302
        %304 = vmatmul.f32.gmra.mxu0 %v277
        %v305 = vpop.f32.mrf.mxu0
        %v306 = vadd.f32 0.0, %v305
        %307 = vmatmul.f32.gmra.mxu0 %v280
        %v308 = vpop.f32.mrf.mxu0
        %v309 = vadd.f32 0.0, %v308
        %310 = vdwg.mxu0
        %v311 = vmax.f32 %v300, 0.0
        %v312 = vmax.f32 %v303, 0.0
        %v313 = vmax.f32 %v306, 0.0
        %v314 = vmax.f32 %v309, 0.0
        %v315 = vadd.f32 %v311, 0.0
        %v316 = vadd.f32 %v312, 0.0
        %v317 = vadd.f32 %v313, 0.0
        %v318 = vadd.f32 %v314, 0.0
        %v319 = vld [vmem:[#allocation2] sm:$0xff]
        %v320 = vld [vmem:[#allocation2 + $0x8] sm:$0xff]
        %v321 = vld [vmem:[#allocation2 + $0x10] sm:$0xff]
        %v322 = vld [vmem:[#allocation2 + $0x18] sm:$0xff]
        %v323 = vadd.f32 %v319, %v315
        %v324 = vadd.f32 %v320, %v316
        %v325 = vadd.f32 %v321, %v317
        %v326 = vadd.f32 %v322, %v318
        %327 = vst [vmem:[#allocation2] sm:$0xff] %v323
        %328 = vst [vmem:[#allocation2 + $0x8] sm:$0xff] %v324
        %329 = vst [vmem:[#allocation2 + $0x10] sm:$0xff] %v325
        %330 = vst [vmem:[#allocation2 + $0x18] sm:$0xff] %v326
        %p331 = scmp.eq.s32.totalorder %s24, 1
        // Predicated region
        $region45: #{tpu_custom_call.1} parent=39 // pred_check
          %p332 = pneg %p331
        $region46: #{tpu_custom_call.1} parent=39 // pred_check_branch
          %334 = sbr.rel (%p332) target = $region48
        $region47: #{tpu_custom_call.1} parent=39 // pred_region
          %v335 = vld [vmem:[#allocation2] sm:$0xff]
          %v336 = vld [vmem:[#allocation2 + $0x8] sm:$0xff]
          %v337 = vld [vmem:[#allocation2 + $0x10] sm:$0xff]
          %v338 = vld [vmem:[#allocation2 + $0x18] sm:$0xff]
          %339 = vadd.xlane.f32.xlu0 %v335
          %v340 = vpop.xlane.xlu0 %339
          %341 = vadd.xlane.f32.xlu0 %v336
          %v342 = vpop.xlane.xlu0 %341
          %343 = vadd.xlane.f32.xlu0 %v337
          %v344 = vpop.xlane.xlu0 %343
          %345 = vadd.xlane.f32.xlu0 %v338
          %v346 = vpop.xlane.xlu0 %345
          %v347 = vmul.f32 %v340, 0.00390625
          %v348 = vmul.f32 %v342, 0.00390625
          %v349 = vmul.f32 %v344, 0.00390625
          %v350 = vmul.f32 %v346, 0.00390625
          %v351 = vld [vmem:[%s3] sm:$0xff]
          %v352 = vld [vmem:[%s3 + $0x8] sm:$0xff]
          %v353 = vld [vmem:[%s3 + $0x10] sm:$0xff]
          %v354 = vld [vmem:[%s3 + $0x18] sm:$0xff]
          %v355 = vmul.f32 %v351, %v347
          %v356 = vmul.f32 %v352, %v348
          %v357 = vmul.f32 %v353, %v349
          %v358 = vmul.f32 %v354, %v350
          %vm359 = vcmask 457728
          %v360 = vsel %vm359, %v355, 0.0
          %v361 = vsel %vm359, %v356, 0.0
          %v362 = vadd.f32 %v360, %v361
          %v363 = vsel %vm359, %v357, 0.0
          %v364 = vadd.f32 %v362, %v363
          %v365 = vsel %vm359, %v358, 0.0
          %v366 = vadd.f32 %v364, %v365
          %v367 = vrot.slane %v366, 4
          %v368 = vadd.f32 %v366, %v367
          %v369 = vrot.slane %v368, 2
          %v370 = vadd.f32 %v368, %v369
          %v371 = vrot.slane %v370, 1
          %v372 = vadd.f32 %v370, %v371
          %v373 = vld [vmem:[%s4] sm:$0x1]
          %v374 = vadd.f32 %v372, %v373
          %vm375 = vcmask 450560
          %376 = vst.msk [vmem:[%s236] sm:$0x1] %vm375, %v374
        $region48: #{tpu_custom_call.1} parent=39 // pred_fallthru
          _
        %s377 = sand.u32 %s151, 1
        %s378 = scalar_lea.sflag [#allocation4], %s377
        %s379 = sand.u32 %s151, 1
        %s380 = scalar_lea.vmem [#allocation3], %s379
        // Predicated region
        $region49: #{tpu_custom_call.1} parent=39 // pred_check
          %p381 = pneg %p161
        $region50: #{tpu_custom_call.1} parent=39 // pred_check_branch
          %383 = sbr.rel (%p381) target = $region52
        $region51: #{tpu_custom_call.1} parent=39 // pred_region
          %385 = vsyncadd %s378, 0
          %s386 = scalar_lea.hbm %s5, %s23
          %s388 = sshll.u32 %s380, 4
          %s389 = int_to_ptr.vmem [resolvable:$true] %s388
          %s390 = sshll.u32 %s386, 4
          %s391 = int_to_ptr.hbm [resolvable:$true] %s390
          %393 = dma.vmem_to_hbm [thread:$0]  %s389, 16, %s391, %s378
        $region52: #{tpu_custom_call.1} parent=39 // pred_fallthru
          _
      $region40: #{tpu_custom_call.1} parent=5 // pred_fallthru
        _
      %p394 = scmp.le.s32.totalorder 2, %s14
      // Predicated region
      $region53: #{tpu_custom_call.1} parent=5 // pred_check
        %p395 = pneg %p394
      $region54: #{tpu_custom_call.1} parent=5 // pred_check_branch
        %397 = sbr.rel (%p395) target = $region56
      $region55: #{tpu_custom_call.1} parent=5 // pred_region
        %s398 = ssub.s32 %s14, 2
        // Predicated region
        $region57: #{tpu_custom_call.1} parent=55 // pred_check
          %p399 = pneg %p167
        $region58: #{tpu_custom_call.1} parent=55 // pred_check_branch
          %401 = sbr.rel (%p399) target = $region60
        $region59: #{tpu_custom_call.1} parent=55 // pred_region
          %s402 = sand.u32 %s152, 1
          %s403 = scalar_lea.sflag [#allocation4], %s402
          %s404 = sand.u32 %s152, 1
          %s405 = scalar_lea.vmem [#allocation3], %s404
          %407 = dma.done %s403, 16
        $region60: #{tpu_custom_call.1} parent=55 // pred_fallthru
          _
      $region56: #{tpu_custom_call.1} parent=5 // pred_fallthru
        _
    $region6: #{tpu_custom_call.1} parent=1 // loop_footer
      %s18 = sadd.s32 1, %s14
    $region7: #{tpu_custom_call.1} parent=1 // loop_footer_branch
      %13 = sbr.rel target = $region3
    $region8: #{tpu_custom_call.1} parent=1 // loop_exit
      _
    %408 = vsyncpa [#allocation4], 1
    %s409 = scalar_lea.sflag [#allocation4], 1
    %410 = vsyncpa %s409, 1

</llo_original>
